<compile_context>
chip_gen: v7x
topology: tpu7x:2x2x1
jax: 0.10.0
libtpu: 0.0.40
codegen_flags: <defaults>
</compile_context>

<pallas_src>
import jax
import jax.numpy as jnp
from jax.experimental import pallas as pl
from jax.experimental.pallas import tpu as pltpu

CHUNK = 512  # lane-chunk width processed per inner-loop iteration


def _round_up(x, m):
    return ((x + m - 1) // m) * m


def vq_kernel(z_ref, cbn_ref, e2_ref, idx_ref):
    # z_ref:   (1, D, TN)    f32 -- channels-first tile of encoder outputs
    # cbn_ref: (K, D)        f32 -- codebook pre-scaled by -2
    # e2_ref:  (K, 1)        f32 -- precomputed ||e_k||^2
    # idx_ref: (1, 1, 1, TN) i32 -- nearest-codebook index per spatial position
    cbn = cbn_ref[...]                                             # (K, D)
    e2 = e2_ref[...]                                               # (K, 1)
    K = cbn.shape[0]
    TN = idx_ref.shape[-1]
    n_chunks = TN // CHUNK                                         # static

    # (K, 1) codebook-row indices; broadcast along lanes inside jnp.where
    # instead of materializing a (K, TN) iota every step.
    row = jax.lax.broadcasted_iota(jnp.int32, (K, 1), 0)

    def body(c, carry):
        start = pl.multiple_of(c * CHUNK, CHUNK)
        z = z_ref[0, :, pl.ds(start, CHUNK)]                       # (D, CH)
        # cross[k, n] = -2 * e_k . z_n on the MXU; + ||e_k||^2 is one VPU pass.
        cross = jnp.dot(cbn, z, preferred_element_type=jnp.float32)  # (K, CH)
        dist = cross + e2                                          # (K, CH)
        # argmin over the codebook (sublane) axis, first-match-wins on ties
        # (matches torch.min tie-breaking).
        min_d = jnp.min(dist, axis=0, keepdims=True)               # (1, CH)
        cand = jnp.where(dist == min_d, row, K)                    # (K, CH)
        idx = jnp.min(cand, axis=0, keepdims=True)                 # (1, CH) i32
        idx_ref[:, :, :, pl.ds(start, CHUNK)] = idx[None, None]
        return carry

    jax.lax.fori_loop(0, n_chunks, body, 0, unroll=True)


def vq_embedding_forward(z_e_x, codebook, tile_cols=None):
    """VQEmbedding.forward: NCHW input -> (B, H, W) int32 codebook indices."""
    B, D, H, W = z_e_x.shape
    K, D2 = codebook.shape
    assert D == D2, "channel dim must equal embedding dim"
    HW = H * W

    # Free reshape (no transpose, no extra HBM traffic): channels-first slab.
    z3 = z_e_x.reshape(B, D, HW)
    # Constants folded once, outside the grid.
    cb_n2 = (-2.0) * codebook                                       # (K, D)
    e2 = jnp.sum(codebook * codebook, axis=-1, keepdims=True)       # (K, 1)

    # Spatial tile width (lane axis): always a multiple of CHUNK (=> multiple
    # of 128) so loads and the index store are unmasked and lane-dense; the
    # inner chunk loop keeps vreg pressure bounded regardless of TN.
    TN_MAX = 8192
    if tile_cols is None:
        TN = min(_round_up(HW, CHUNK), TN_MAX)
        if B == 1 and HW > CHUNK:
            # v7x megacore: guarantee >= 2 parallel grid blocks when B == 1.
            TN = min(TN, max(CHUNK, _round_up(pl.cdiv(HW, 2), CHUNK)))
    else:
        TN = min(_round_up(tile_cols, CHUNK), TN_MAX)
    n_tiles = pl.cdiv(HW, TN)

    out = pl.pallas_call(
        vq_kernel,
        out_shape=jax.ShapeDtypeStruct((B, n_tiles, 1, TN), jnp.int32),
        grid_spec=pltpu.PrefetchScalarGridSpec(
            num_scalar_prefetch=0,
            grid=(B, n_tiles),
            in_specs=[
                pl.BlockSpec((1, D, TN), lambda b, t: (b, 0, t)),   # z tile
                pl.BlockSpec((K, D), lambda b, t: (0, 0)),          # -2*codebook
                pl.BlockSpec((K, 1), lambda b, t: (0, 0)),          # ||e_k||^2
            ],
            out_specs=pl.BlockSpec((1, 1, 1, TN), lambda b, t: (b, t, 0, 0)),
        ),
        compiler_params=pltpu.CompilerParams(
            dimension_semantics=("parallel", "parallel")),
    )(z3, cb_n2, e2)

    # Drop the padded tail (no-op slice when HW == n_tiles * TN).
    idx = out.reshape(B, n_tiles * TN)[:, :HW].reshape(B, H, W)
    return idx


def vq_reference(z_e_x, codebook):
    """Pure-JAX reference matching the PyTorch vq() semantics."""
    B, D, H, W = z_e_x.shape
    z = jnp.transpose(z_e_x, (0, 2, 3, 1)).reshape(-1, D)
    dist = (jnp.sum(z * z, axis=-1, keepdims=True)
            - 2.0 * (z @ codebook.T)
            + jnp.sum(codebook * codebook, axis=-1)[None, :])
    return jnp.argmin(dist, axis=-1).astype(jnp.int32).reshape(B, H, W)


if __name__ == "__main__":
    key = jax.random.PRNGKey(0)
    k_cb, k1, k2, k3, k4 = jax.random.split(key, 5)

    # VQEmbedding(K, D): embedding weight ~ U(-1/K, 1/K)
    K, D = 32, 8
    codebook = jax.random.uniform(
        k_cb, (K, D), dtype=jnp.float32, minval=-1.0 / K, maxval=1.0 / K)

    # Case 1: small single-tile path (HW=256 -> TN=512, padded tail sliced).
    B, H, W = 2, 16, 16
    x1 = jax.random.normal(k1, (B, D, H, W), dtype=jnp.float32)
    out1 = jax.block_until_ready(vq_embedding_forward(x1, codebook))
    assert out1.shape == (B, H, W)
    assert jnp.array_equal(out1, vq_reference(x1, codebook)), "mismatch case 1"

    # Case 2: H*W not a multiple of 128 (324 -> TN=512 with padded columns).
    x2 = jax.random.normal(k2, (2, D, 18, 18), dtype=jnp.float32)
    out2 = jax.block_until_ready(vq_embedding_forward(x2, codebook))
    assert out2.shape == (2, 18, 18)
    assert jnp.array_equal(out2, vq_reference(x2, codebook)), "mismatch case 2"

    # Case 3: multi-tile grid, multi-chunk inner loop, ragged last tile
    # (HW=1600, TN=1024 -> 2 tiles x 2 chunks, last tile 576 valid columns).
    x3 = jax.random.normal(k3, (2, D, 40, 40), dtype=jnp.float32)
    out3 = jax.block_until_ready(
        vq_embedding_forward(x3, codebook, tile_cols=1024))
    assert out3.shape == (2, 40, 40)
    assert jnp.array_equal(out3, vq_reference(x3, codebook)), "mismatch case 3"

    # Case 4: B == 1 -> spatial axis split so both v7x TensorCores get a block.
    x4 = jax.random.normal(k4, (1, D, 64, 64), dtype=jnp.float32)
    out4 = jax.block_until_ready(vq_embedding_forward(x4, codebook))
    assert out4.shape == (1, 64, 64)
    assert jnp.array_equal(out4, vq_reference(x4, codebook)), "mismatch case 4"

    print("KERNEL_OK")
</pallas_src>

<mosaic_0001>
module attributes {stable_mosaic.version = 11 : i64} {
  func.func @vq_kernel(%arg0: i32, %arg1: i32, %arg2: memref<1x8x512xf32, #tpu.memory_space<vmem>>, %arg3: memref<32x8xf32, #tpu.memory_space<vmem>>, %arg4: memref<32x1xf32, #tpu.memory_space<vmem>>, %arg5: memref<1x1x1x512xi32, #tpu.memory_space<vmem>>) attributes {dimension_semantics = [#tpu.dimension_semantics<parallel>, #tpu.dimension_semantics<parallel>], iteration_bounds = array<i64: 2, 1>, scalar_prefetch = 0 : i64, scratch_operands = 0 : i64, tpu.core_type = #tpu.core_type<tc>, window_params = [{transform_indices = @transform_0, window_bounds = array<i64: 1, 8, 512>}, {pipeline_mode = #tpu.pipeline_mode<synchronous>, transform_indices = @transform_1, window_bounds = array<i64: 32, 8>}, {pipeline_mode = #tpu.pipeline_mode<synchronous>, transform_indices = @transform_2, window_bounds = array<i64: 32, 1>}, {transform_indices = @transform_3, window_bounds = array<i64: 1, 1, 1, 512>}]} {
    %c0 = arith.constant 0 : index
    %c0_0 = arith.constant 0 : index
    %0 = vector.load %arg3[%c0, %c0_0] : memref<32x8xf32, #tpu.memory_space<vmem>>, vector<32x8xf32>
    %c0_1 = arith.constant 0 : index
    %c0_2 = arith.constant 0 : index
    %1 = vector.load %arg4[%c0_1, %c0_2] : memref<32x1xf32, #tpu.memory_space<vmem>>, vector<32x1xf32>
    %2 = tpu.iota {dimensions = array<i32: 0>} : vector<32x1xi32>
    %c0_i32 = arith.constant 0 : i32
    %c512_i32 = arith.constant 512 : i32
    %3 = arith.muli %c0_i32, %c512_i32 : i32
    %4 = tpu.assume_multiple %3, 512 : i32
    %c0_3 = arith.constant 0 : index
    %c0_4 = arith.constant 0 : index
    %5 = arith.index_cast %4 : i32 to index
    %6 = vector.load %arg2[%c0_3, %c0_4, %5] : memref<1x8x512xf32, #tpu.memory_space<vmem>>, vector<1x8x512xf32>
    %7 = vector.shape_cast %6 : vector<1x8x512xf32> to vector<8x512xf32>
    %cst = arith.constant dense<0.000000e+00> : vector<32x512xf32>
    %8 = tpu.matmul %0, %7, %cst {dimension_numbers = #tpu.dot_dimension_numbers<[1], [0], [0], [1], [0, 0, 1, 1], [], []>} : vector<32x8xf32>, vector<8x512xf32>, vector<32x512xf32> -> vector<32x512xf32>
    %9 = vector.broadcast %1 : vector<32x1xf32> to vector<32x512xf32>
    %10 = arith.addf %8, %9 : vector<32x512xf32>
    %cst_5 = arith.constant dense<0x7F800000> : vector<512xf32>
    %11 = vector.multi_reduction <minimumf>, %10, %cst_5 [0] : vector<32x512xf32> to vector<512xf32>
    %12 = vector.shape_cast %11 : vector<512xf32> to vector<1x512xf32>
    %13 = vector.broadcast %12 : vector<1x512xf32> to vector<32x512xf32>
    %14 = arith.cmpf oeq, %10, %13 : vector<32x512xf32>
    %c32_i32 = arith.constant 32 : i32
    %15 = vector.shape_cast %2 : vector<32x1xi32> to vector<32x1xi32>
    %16 = vector.broadcast %15 : vector<32x1xi32> to vector<32x512xi32>
    %17 = vector.broadcast %c32_i32 : i32 to vector<32x512xi32>
    %18 = arith.select %14, %16, %17 : vector<32x512xi1>, vector<32x512xi32>
    %cst_6 = arith.constant dense<2147483647> : vector<512xi32>
    %19 = vector.multi_reduction <minsi>, %18, %cst_6 [0] : vector<32x512xi32> to vector<512xi32>
    %20 = vector.shape_cast %19 : vector<512xi32> to vector<1x512xi32>
    %21 = vector.shape_cast %20 : vector<1x512xi32> to vector<1x1x1x512xi32>
    %c0_7 = arith.constant 0 : index
    %c0_8 = arith.constant 0 : index
    %c0_9 = arith.constant 0 : index
    %22 = arith.index_cast %4 : i32 to index
    %23 = vector.load %arg5[%c0_7, %c0_8, %c0_9, %22] : memref<1x1x1x512xi32, #tpu.memory_space<vmem>>, vector<1x1x1x512xi32>
    tpu.vector_store %arg5[%c0_7, %c0_8, %c0_9, %22], %21 {strides = array<i32>} : memref<1x1x1x512xi32, #tpu.memory_space<vmem>>, vector<1x1x1x512xi32>,
    %c1_i32 = arith.constant 1 : i32
    return
  }
  func.func @transform_0(%arg0: i32, %arg1: i32) -> (i32, i32, i32) {
    %c0_i32 = arith.constant 0 : i32
    %c0_i32_0 = arith.constant 0 : i32
    return %arg0, %c0_i32, %arg1 : i32, i32, i32
  }
  func.func @transform_1(%arg0: i32, %arg1: i32) -> (i32, i32) {
    %c0_i32 = arith.constant 0 : i32
    %c0_i32_0 = arith.constant 0 : i32
    %c0_i32_1 = arith.constant 0 : i32
    return %c0_i32, %c0_i32_0 : i32, i32
  }
  func.func @transform_2(%arg0: i32, %arg1: i32) -> (i32, i32) {
    %c0_i32 = arith.constant 0 : i32
    %c0_i32_0 = arith.constant 0 : i32
    %c0_i32_1 = arith.constant 0 : i32
    return %c0_i32, %c0_i32_0 : i32, i32
  }
  func.func @transform_3(%arg0: i32, %arg1: i32) -> (i32, i32, i32, i32) {
    %c0_i32 = arith.constant 0 : i32
    %c0_i32_0 = arith.constant 0 : i32
    %c0_i32_1 = arith.constant 0 : i32
    return %arg0, %arg1, %c0_i32, %c0_i32_0 : i32, i32, i32, i32
  }
}

</mosaic_0001>

<llo_original>
// kernel: tpu_custom_call.1
$region0: #{tpu_custom_call.1}
  #allocation0 [shape = 'u32[]', space=smem, size = 0x4, offset = 0x4, fixed_abs, tag = 'smem constant byte address 0x4 - core index']
  #allocation1 [shape = 'u32[144,128]{1,0:T(1,128)}', space=vmem, size = 0x12000, scoped, tag = 'internal scratch']
  %s0 = inlined_call_operand.vmem [shape: f32[2,8,256], index: 0, kind: input, shape index: {}]
  %s1 = inlined_call_operand.vmem [shape: f32[32,8], index: 1, kind: input, shape index: {}]
  %s2 = inlined_call_operand.vmem [shape: f32[32,1], index: 2, kind: input, shape index: {}]
  %s3 = inlined_call_operand.hbm [shape: s32[2,1,1,512], index: 3, kind: output, shape index: {}]
  %s4 = sld [smem:[#allocation0]]
  $region45: #{tpu_custom_call.1} parent=0
    _
  %s6 = ssub.s32 1, %s4
  %s7 = scalar_select 0, %s6, %s4
  $region1: #{tpu_custom_call.1} parent=0
    #allocation2 [shape = 'u8[4096]{0}', space=vmem, size = 0x1000, scoped, tag = 'output window, operand 0']
    #allocation3 [shape = 's32[2]{0}', space=sflag, size = 0x8, scoped, tag = 'scoped memory for tpu_custom_call.1']
    %8 = vsyncpa [#allocation3], 0
    %s9 = scalar_lea.sflag [#allocation3], 1
    %10 = vsyncpa %s9, 0
    loop: start=0, step=1, limit=4
    $region2: #{tpu_custom_call.1} parent=1 // loop_pre_header
      _
    $region3: #{tpu_custom_call.1} parent=1 // loop_header
      %s12 = sphi 0, %s16
      %p13 = scmp.ge.s32.totalorder %s12, 4
      %s19 = sphi 0, %s31
      %s20 = sphi 0, %s27
      %s21 = sphi 0, %s19
      %s22 = sphi 0, %s20
      %s23 = sphi 0, %s21
      %s24 = sphi 0, %s22
      %s36 = sphi 0, %s38
      %s39 = sphi 0, %s36
      %s40 = sphi 0, %s39
      %s56 = sphi 0, %s40
      %s60 = sphi 0, %s60
      %s62 = sphi 0, %s60
      %s63 = sphi 0, %s62
      %s77 = sphi 0, %s63
      %s81 = sphi 0, %s81
      %s83 = sphi 0, %s81
      %s84 = sphi 0, %s83
      %s98 = sphi 0, %s84
      %s106 = sphi 0, %s108
      %s109 = sphi 0, %s106
      %s110 = sphi 0, %s109
      %s126 = sphi 0, %s110
    $region4: #{tpu_custom_call.1} parent=1 // loop_header_branch
      %15 = sbr.rel (%p13) target = $region8
    $region5: #{tpu_custom_call.1} parent=1 // loop_body
      %s17 = ssub.s32 %s12, 1
      %s18 = ssub.s32 %s12, 2
      %s25 = sadd.s32 1, %s20
      %p26 = scmp.ge.s32.totalorder %s25, 1
      %s27 = scalar_select %p26, 0, %s25
      %s28 = sadd.s32 1, %s19
      %s29 = scalar_select %p26, %s28, %s19
      %p30 = scmp.ge.s32.totalorder %s29, 2
      %s31 = scalar_select %p30, 0, %s29
      %s32 = ssub.s32 %s19, %s31
      %s33 = ssub.s32 %s20, %s27
      %s34 = sor.u32 %s32, %s33
      %p35 = scmp.eq.s32.totalorder %s34, 0
      %s37 = sadd.s32 %s36, 1
      %s38 = scalar_select %p35, %s36, %s37
      %p41 = pneg %p35
      %p42 = scmp.eq.s32.totalorder %s12, 1
      %p43 = por %p41, %p42
      %p44 = scmp.ne.s32.totalorder %s36, %s39
      %p45 = scmp.eq.s32.totalorder %s12, 0
      %p46 = por %p44, %p45
      %p47 = scmp.ne.s32.totalorder %s36, %s39
      %p48 = scmp.eq.s32.totalorder %s17, 1
      %p49 = por %p47, %p48
      %p50 = scmp.ne.s32.totalorder %s39, %s40
      %p51 = scmp.eq.s32.totalorder %s17, 0
      %p52 = por %p50, %p51
      %p53 = scmp.ne.s32.totalorder %s39, %s40
      %p54 = scmp.eq.s32.totalorder %s18, 1
      %p55 = por %p53, %p54
      %p57 = scmp.ne.s32.totalorder %s40, %s56
      %p58 = scmp.eq.s32.totalorder %s18, 0
      %p59 = por %p57, %p58
      %s61 = sadd.s32 %s60, 1
      %p64 = scmp.eq.s32.totalorder %s12, 1
      %p65 = scmp.ne.s32.totalorder %s60, %s62
      %p66 = scmp.eq.s32.totalorder %s12, 0
      %p67 = por %p65, %p66
      %p68 = scmp.ne.s32.totalorder %s60, %s62
      %p69 = scmp.eq.s32.totalorder %s17, 1
      %p70 = por %p68, %p69
      %p71 = scmp.ne.s32.totalorder %s62, %s63
      %p72 = scmp.eq.s32.totalorder %s17, 0
      %p73 = por %p71, %p72
      %p74 = scmp.ne.s32.totalorder %s62, %s63
      %p75 = scmp.eq.s32.totalorder %s18, 1
      %p76 = por %p74, %p75
      %p78 = scmp.ne.s32.totalorder %s63, %s77
      %p79 = scmp.eq.s32.totalorder %s18, 0
      %p80 = por %p78, %p79
      %s82 = sadd.s32 %s81, 1
      %p85 = scmp.eq.s32.totalorder %s12, 1
      %p86 = scmp.ne.s32.totalorder %s81, %s83
      %p87 = scmp.eq.s32.totalorder %s12, 0
      %p88 = por %p86, %p87
      %p89 = scmp.ne.s32.totalorder %s81, %s83
      %p90 = scmp.eq.s32.totalorder %s17, 1
      %p91 = por %p89, %p90
      %p92 = scmp.ne.s32.totalorder %s83, %s84
      %p93 = scmp.eq.s32.totalorder %s17, 0
      %p94 = por %p92, %p93
      %p95 = scmp.ne.s32.totalorder %s83, %s84
      %p96 = scmp.eq.s32.totalorder %s18, 1
      %p97 = por %p95, %p96
      %p99 = scmp.ne.s32.totalorder %s84, %s98
      %p100 = scmp.eq.s32.totalorder %s18, 0
      %p101 = por %p99, %p100
      %s102 = ssub.s32 %s19, %s31
      %s103 = ssub.s32 %s20, %s27
      %s104 = sor.u32 %s102, %s103
      %p105 = scmp.eq.s32.totalorder %s104, 0
      %s107 = sadd.s32 %s106, 1
      %s108 = scalar_select %p105, %s106, %s107
      %p111 = pneg %p105
      %p112 = scmp.eq.s32.totalorder %s12, 1
      %p113 = por %p111, %p112
      %p114 = scmp.ne.s32.totalorder %s106, %s109
      %p115 = scmp.eq.s32.totalorder %s12, 0
      %p116 = por %p114, %p115
      %p117 = scmp.ne.s32.totalorder %s106, %s109
      %p118 = scmp.eq.s32.totalorder %s17, 1
      %p119 = por %p117, %p118
      %p120 = scmp.ne.s32.totalorder %s109, %s110
      %p121 = scmp.eq.s32.totalorder %s17, 0
      %p122 = por %p120, %p121
      %p123 = scmp.ne.s32.totalorder %s109, %s110
      %p124 = scmp.eq.s32.totalorder %s18, 1
      %p125 = por %p123, %p124
      %p127 = scmp.ne.s32.totalorder %s110, %s126
      %p128 = scmp.eq.s32.totalorder %s18, 0
      %p129 = por %p127, %p128
      %p130 = scmp.le.s32.totalorder 1, %s12
      %p131 = scmp.lt.s32.totalorder %s12, 3
      %p132 = pnand %p130, %p131
      %p133 = pneg %p132
      // Predicated region
      $region9: #{tpu_custom_call.1} parent=5 // pred_check
        _
      $region10: #{tpu_custom_call.1} parent=5 // pred_check_branch
        %135 = sbr.rel (%p132) target = $region12
      $region11: #{tpu_custom_call.1} parent=5 // pred_region
        %s136 = ssub.s32 %s12, 1
        // Predicated region
        $region13: #{tpu_custom_call.1} parent=11 // pred_check
          %p137 = pneg %p73
        $region14: #{tpu_custom_call.1} parent=11 // pred_check_branch
          %139 = sbr.rel (%p137) target = $region16
        $region15: #{tpu_custom_call.1} parent=11 // pred_region
          _
        $region16: #{tpu_custom_call.1} parent=11 // pred_fallthru
          _
        // Predicated region
        $region17: #{tpu_custom_call.1} parent=11 // pred_check
          %p140 = pneg %p94
        $region18: #{tpu_custom_call.1} parent=11 // pred_check_branch
          %142 = sbr.rel (%p140) target = $region20
        $region19: #{tpu_custom_call.1} parent=11 // pred_region
          _
        $region20: #{tpu_custom_call.1} parent=11 // pred_fallthru
          _
      $region12: #{tpu_custom_call.1} parent=5 // pred_fallthru
        _
      %p143 = scmp.lt.s32.totalorder %s12, 2
      // Predicated region
      $region21: #{tpu_custom_call.1} parent=5 // pred_check
        %p144 = pneg %p143
      $region22: #{tpu_custom_call.1} parent=5 // pred_check_branch
        %146 = sbr.rel (%p144) target = $region24
      $region23: #{tpu_custom_call.1} parent=5 // pred_region
        // Predicated region
        $region25: #{tpu_custom_call.1} parent=23 // pred_check
          %p147 = pneg %p46
        $region26: #{tpu_custom_call.1} parent=23 // pred_check_branch
          %149 = sbr.rel (%p147) target = $region28
        $region27: #{tpu_custom_call.1} parent=23 // pred_region
          %s150 = smul.u32 4, %s20
          %s151 = ssub.s32 2, %s150
          %s152 = smul.u32 128, %s151
          %p153 = scmp.lt.s32.totalorder %s19, 1
          %s154 = scalar_select %p153, %s19, 1
          %p155 = scmp.lt.s32.totalorder %s150, 1
          %s156 = scalar_select %p155, %s150, 1
          %s157 = smul.addr %s154, 2
          %s158 = sadd.s32 %s156, %s157
          %s159 = smul.addr %s158, 8
          %s160 = scalar_lea.vmem %s0, %s159
          %s161 = smul.u32 4, %s20
          %s162 = ssub.s32 2, %s161
          %s163 = smul.u32 128, %s162
        $region28: #{tpu_custom_call.1} parent=23 // pred_fallthru
          _
      $region24: #{tpu_custom_call.1} parent=5 // pred_fallthru
        _
      %p164 = scmp.le.s32.totalorder 1, %s12
      %p165 = scmp.lt.s32.totalorder %s12, 3
      %p166 = pnand %p164, %p165
      %p167 = pneg %p166
      // Predicated region
      $region29: #{tpu_custom_call.1} parent=5 // pred_check
        _
      $region30: #{tpu_custom_call.1} parent=5 // pred_check_branch
        %169 = sbr.rel (%p166) target = $region32
      $region31: #{tpu_custom_call.1} parent=5 // pred_region
        %s170 = ssub.s32 %s12, 1
        %s171 = smul.u32 4, %s22
        %s172 = ssub.s32 2, %s171
        %s173 = smul.u32 128, %s172
        %p174 = scmp.lt.s32.totalorder %s21, 1
        %s175 = scalar_select %p174, %s21, 1
        %p176 = scmp.lt.s32.totalorder %s171, 1
        %s177 = scalar_select %p176, %s171, 1
        %s178 = smul.addr %s175, 2
        %s179 = sadd.s32 %s177, %s178
        %s180 = smul.addr %s179, 8
        %s181 = scalar_lea.vmem %s0, %s180
        %p182 = pneg %p52
        %p183 = pneg %p49
        %p184 = pneg %p73
        %p185 = pneg %p70
        %p186 = pneg %p94
        %p187 = pneg %p91
        %p188 = pneg %p122
        %p189 = pneg %p119
        %s190 = sand.u32 %s109, 1
        %s191 = scalar_lea.sflag [#allocation3], %s190
        %s192 = sand.u32 %s109, 1
        %s193 = smul.addr %s192, 4
        %s194 = scalar_lea.vmem [#allocation2], %s193
        %s195 = smul.u32 4, %s22
        %s196 = ssub.s32 2, %s195
        %s197 = smul.u32 128, %s196
        %p198 = scmp.lt.s32.totalorder %s21, 1
        %s199 = scalar_select %p198, %s21, 1
        %p200 = scmp.lt.s32.totalorder %s195, 1
        %s201 = scalar_select %p200, %s195, 1
        %s202 = smul.addr %s199, 2
        %s203 = sadd.s32 %s201, %s202
        %s204 = smul.addr %s203, 8
        %s205 = scalar_lea.vmem %s0, %s204
        %s206 = smul.u32 4, %s22
        %s207 = ssub.s32 2, %s206
        %s208 = smul.u32 128, %s207
        %v209 = vld [vmem:[%s1] sm:$0xff]
        %v210 = vld [vmem:[%s1 + $0x8] sm:$0xff]
        %v211 = vld [vmem:[%s1 + $0x10] sm:$0xff]
        %v212 = vld [vmem:[%s1 + $0x18] sm:$0xff]
        %v213 = vld [vmem:[%s2] sm:$0xff]
        %v214 = vld [vmem:[%s2 + $0x8] sm:$0xff]
        %v215 = vld [vmem:[%s2 + $0x10] sm:$0xff]
        %v216 = vld [vmem:[%s2 + $0x18] sm:$0xff]
        %v217 = vlaneseq
        %v218 = vshrl.u32 %v217, 7
        %v219 = vadd.s32 %v218, 8
        %v220 = vadd.s32 %v218, 16
        %v221 = vadd.s32 %v218, 24
        %v222 = vld [vmem:[%s205] sm:$0xff]
        %v223 = vld [vmem:[%s205 + $0x8] sm:$0xff]
        %v224 = vld [vmem:[%s205 + $0x10] sm:$0xff]
        %v225 = vld [vmem:[%s205 + $0x18] sm:$0xff]
        %227 = vset.pattern.permute.xlu0 0
        %228 = vperm.xlu0 %227, %v213
        %v229 = vpop.permute.xlu0 %228
        %232 = vset.pattern.permute.xlu0 0
        %233 = vperm.xlu0 %232, %v214
        %v234 = vpop.permute.xlu0 %233
        %237 = vset.pattern.permute.xlu0 0
        %238 = vperm.xlu0 %237, %v215
        %v239 = vpop.permute.xlu0 %238
        %242 = vset.pattern.permute.xlu0 0
        %243 = vperm.xlu0 %242, %v216
        %v244 = vpop.permute.xlu0 %243
        %vm246 = vcmask 64512
        %v248 = vsel %vm246, %v209, 0
        %v251 = vsel %vm246, %v210, 0
        %v254 = vsel %vm246, %v211, 0
        %v257 = vsel %vm246, %v212, 0
        %259 = vmatprep.subr.mxu0 %v223
        %260 = vmatpush1.msra.mxu0 %v222
        %261 = vmatprep.subr.mxu0 0.0
        %262 = vmatpush1.msra.mxu0 0.0
        %263 = vmatprep.subr.mxu0 0.0
        %264 = vmatpush1.msra.mxu0 0.0
        %265 = vmatprep.subr.mxu0 0.0
        %266 = vmatpush1.msra.mxu0 0.0
        %267 = vmatprep.subr.mxu0 0.0
        %268 = vmatpush1.msra.mxu0 0.0
        %269 = vmatprep.subr.mxu0 0.0
        %270 = vmatpush1.msra.mxu0 0.0
        %271 = vmatprep.subr.mxu0 0.0
        %272 = vmatpush1.msra.mxu0 0.0
        %273 = vmatprep.subr.mxu0 0.0
        %274 = vmatpush1.msra.mxu0 0.0
        %275 = vmatprep.subr.mxu0 0.0
        %276 = vmatpush1.msra.mxu0 0.0
        %277 = vmatprep.subr.mxu0 0.0
        %278 = vmatpush1.msra.mxu0 0.0
        %279 = vmatprep.subr.mxu0 0.0
        %280 = vmatpush1.msra.mxu0 0.0
        %281 = vmatprep.subr.mxu0 0.0
        %282 = vmatpush1.msra.mxu0 0.0
        %283 = vmatprep.subr.mxu0 0.0
        %284 = vmatpush1.msra.mxu0 0.0
        %285 = vmatprep.subr.mxu0 0.0
        %286 = vmatpush1.msra.mxu0 0.0
        %287 = vmatprep.subr.mxu0 0.0
        %288 = vmatpush1.msra.mxu0 0.0
        %289 = vmatprep.subr.mxu0 0.0
        %290 = vmatpush1.msra.mxu0 0.0
        %291 = vmatprep.subr.mxu0 0.0
        %292 = vmatpush1.msra.mxu0 0.0
        %293 = vmatprep.subr.mxu0 0.0
        %294 = vmatpush1.msra.mxu0 0.0
        %295 = vmatprep.subr.mxu0 0.0
        %296 = vmatpush1.msra.mxu0 0.0
        %297 = vmatprep.subr.mxu0 0.0
        %298 = vmatpush1.msra.mxu0 0.0
        %299 = vmatprep.subr.mxu0 0.0
        %300 = vmatpush1.msra.mxu0 0.0
        %301 = vmatprep.subr.mxu0 0.0
        %302 = vmatpush1.msra.mxu0 0.0
        %303 = vmatprep.subr.mxu0 0.0
        %304 = vmatpush1.msra.mxu0 0.0
        %305 = vmatprep.subr.mxu0 0.0
        %306 = vmatpush1.msra.mxu0 0.0
        %307 = vmatprep.subr.mxu0 0.0
        %308 = vmatpush1.msra.mxu0 0.0
        %309 = vmatprep.subr.mxu0 0.0
        %310 = vmatpush1.msra.mxu0 0.0
        %311 = vmatprep.subr.mxu0 0.0
        %312 = vmatpush1.msra.mxu0 0.0
        %313 = vmatprep.subr.mxu0 0.0
        %314 = vmatpush1.msra.mxu0 0.0
        %315 = vmatprep.subr.mxu0 0.0
        %316 = vmatpush1.msra.mxu0 0.0
        %317 = vmatprep.subr.mxu0 0.0
        %318 = vmatpush1.msra.mxu0 0.0
        %319 = vmatprep.subr.mxu0 0.0
        %320 = vmatpush1.msra.mxu0 0.0
        %321 = vmatprep.subr.mxu0 0.0
        %322 = vmatpush1.msra.mxu0 0.0
        %323 = vmatprep.mubr.f32.mxu0 0.0
        %324 = vmatmul.mubr.f32.gmra.mrb[0].mxu0 %v248
        %v325 = vpop.f32.mrb[0].mxu0
        %v326 = vadd.f32 %v229, %v325
        %v327 = vpop.f32.mrb[0].mxu0
        %v328 = vadd.f32 %v229, %v327
        %329 = vmatprep.mubr.f32.mxu0 0.0
        %330 = vmatmul.mubr.f32.gmra.mrb[0].mxu0 %v251
        %v331 = vpop.f32.mrb[0].mxu0
        %v332 = vadd.f32 %v234, %v331
        %v333 = vpop.f32.mrb[0].mxu0
        %v334 = vadd.f32 %v234, %v333
        %335 = vmatprep.mubr.f32.mxu0 0.0
        %336 = vmatmul.mubr.f32.gmra.mrb[0].mxu0 %v254
        %v337 = vpop.f32.mrb[0].mxu0
        %v338 = vadd.f32 %v239, %v337
        %v339 = vpop.f32.mrb[0].mxu0
        %v340 = vadd.f32 %v239, %v339
        %341 = vmatprep.mubr.f32.mxu0 0.0
        %342 = vmatmul.mubr.f32.gmra.mrb[0].mxu0 %v257
        %v343 = vpop.f32.mrb[0].mxu0
        %v344 = vadd.f32 %v244, %v343
        %v345 = vpop.f32.mrb[0].mxu0
        %v346 = vadd.f32 %v244, %v345
        %347 = vdwg.mxu0
        %348 = vmatprep.subr.mxu0 %v225
        %349 = vmatpush1.msra.mxu0 %v224
        %350 = vmatprep.subr.mxu0 0.0
        %351 = vmatpush1.msra.mxu0 0.0
        %352 = vmatprep.subr.mxu0 0.0
        %353 = vmatpush1.msra.mxu0 0.0
        %354 = vmatprep.subr.mxu0 0.0
        %355 = vmatpush1.msra.mxu0 0.0
        %356 = vmatprep.subr.mxu0 0.0
        %357 = vmatpush1.msra.mxu0 0.0
        %358 = vmatprep.subr.mxu0 0.0
        %359 = vmatpush1.msra.mxu0 0.0
        %360 = vmatprep.subr.mxu0 0.0
        %361 = vmatpush1.msra.mxu0 0.0
        %362 = vmatprep.subr.mxu0 0.0
        %363 = vmatpush1.msra.mxu0 0.0
        %364 = vmatprep.subr.mxu0 0.0
        %365 = vmatpush1.msra.mxu0 0.0
        %366 = vmatprep.subr.mxu0 0.0
        %367 = vmatpush1.msra.mxu0 0.0
        %368 = vmatprep.subr.mxu0 0.0
        %369 = vmatpush1.msra.mxu0 0.0
        %370 = vmatprep.subr.mxu0 0.0
        %371 = vmatpush1.msra.mxu0 0.0
        %372 = vmatprep.subr.mxu0 0.0
        %373 = vmatpush1.msra.mxu0 0.0
        %374 = vmatprep.subr.mxu0 0.0
        %375 = vmatpush1.msra.mxu0 0.0
        %376 = vmatprep.subr.mxu0 0.0
        %377 = vmatpush1.msra.mxu0 0.0
        %378 = vmatprep.subr.mxu0 0.0
        %379 = vmatpush1.msra.mxu0 0.0
        %380 = vmatprep.subr.mxu0 0.0
        %381 = vmatpush1.msra.mxu0 0.0
        %382 = vmatprep.subr.mxu0 0.0
        %383 = vmatpush1.msra.mxu0 0.0
        %384 = vmatprep.subr.mxu0 0.0
        %385 = vmatpush1.msra.mxu0 0.0
        %386 = vmatprep.subr.mxu0 0.0
        %387 = vmatpush1.msra.mxu0 0.0
        %388 = vmatprep.subr.mxu0 0.0
        %389 = vmatpush1.msra.mxu0 0.0
        %390 = vmatprep.subr.mxu0 0.0
        %391 = vmatpush1.msra.mxu0 0.0
        %392 = vmatprep.subr.mxu0 0.0
        %393 = vmatpush1.msra.mxu0 0.0
        %394 = vmatprep.subr.mxu0 0.0
        %395 = vmatpush1.msra.mxu0 0.0
        %396 = vmatprep.subr.mxu0 0.0
        %397 = vmatpush1.msra.mxu0 0.0
        %398 = vmatprep.subr.mxu0 0.0
        %399 = vmatpush1.msra.mxu0 0.0
        %400 = vmatprep.subr.mxu0 0.0
        %401 = vmatpush1.msra.mxu0 0.0
        %402 = vmatprep.subr.mxu0 0.0
        %403 = vmatpush1.msra.mxu0 0.0
        %404 = vmatprep.subr.mxu0 0.0
        %405 = vmatpush1.msra.mxu0 0.0
        %406 = vmatprep.subr.mxu0 0.0
        %407 = vmatpush1.msra.mxu0 0.0
        %408 = vmatprep.subr.mxu0 0.0
        %409 = vmatpush1.msra.mxu0 0.0
        %410 = vmatprep.subr.mxu0 0.0
        %411 = vmatpush1.msra.mxu0 0.0
        %412 = vmatprep.mubr.f32.mxu0 0.0
        %413 = vmatmul.mubr.f32.gmra.mrb[0].mxu0 %v248
        %v414 = vpop.f32.mrb[0].mxu0
        %v415 = vadd.f32 %v229, %v414
        %v416 = vpop.f32.mrb[0].mxu0
        %v417 = vadd.f32 %v229, %v416
        %418 = vmatprep.mubr.f32.mxu0 0.0
        %419 = vmatmul.mubr.f32.gmra.mrb[0].mxu0 %v251
        %v420 = vpop.f32.mrb[0].mxu0
        %v421 = vadd.f32 %v234, %v420
        %v422 = vpop.f32.mrb[0].mxu0
        %v423 = vadd.f32 %v234, %v422
        %424 = vmatprep.mubr.f32.mxu0 0.0
        %425 = vmatmul.mubr.f32.gmra.mrb[0].mxu0 %v254
        %v426 = vpop.f32.mrb[0].mxu0
        %v427 = vadd.f32 %v239, %v426
        %v428 = vpop.f32.mrb[0].mxu0
        %v429 = vadd.f32 %v239, %v428
        %430 = vmatprep.mubr.f32.mxu0 0.0
        %431 = vmatmul.mubr.f32.gmra.mrb[0].mxu0 %v257
        %v432 = vpop.f32.mrb[0].mxu0
        %v433 = vadd.f32 %v244, %v432
        %v434 = vpop.f32.mrb[0].mxu0
        %v435 = vadd.f32 %v244, %v434
        %436 = vdwg.mxu0
        %v437 = vmin.f32 %v326, %v332
        %v438 = vmin.f32 %v437, %v338
        %v439 = vmin.f32 %v438, %v344
        %v440 = vrot.slane %v439, 4
        %v441 = vmin.f32 %v439, %v440
        %v442 = vrot.slane %v441, 2
        %v443 = vmin.f32 %v441, %v442
        %v444 = vrot.slane %v443, 1
        %v445 = vmin.f32 %v443, %v444
        %v446 = vmin.f32 %v328, %v334
        %v447 = vmin.f32 %v446, %v340
        %v448 = vmin.f32 %v447, %v346
        %v449 = vrot.slane %v448, 4
        %v450 = vmin.f32 %v448, %v449
        %v451 = vrot.slane %v450, 2
        %v452 = vmin.f32 %v450, %v451
        %v453 = vrot.slane %v452, 1
        %v454 = vmin.f32 %v452, %v453
        %v455 = vmin.f32 %v415, %v421
        %v456 = vmin.f32 %v455, %v427
        %v457 = vmin.f32 %v456, %v433
        %v458 = vrot.slane %v457, 4
        %v459 = vmin.f32 %v457, %v458
        %v460 = vrot.slane %v459, 2
        %v461 = vmin.f32 %v459, %v460
        %v462 = vrot.slane %v461, 1
        %v463 = vmin.f32 %v461, %v462
        %v464 = vmin.f32 %v417, %v423
        %v465 = vmin.f32 %v464, %v429
        %v466 = vmin.f32 %v465, %v435
        %v467 = vrot.slane %v466, 4
        %v468 = vmin.f32 %v466, %v467
        %v469 = vrot.slane %v468, 2
        %v470 = vmin.f32 %v468, %v469
        %v471 = vrot.slane %v470, 1
        %v472 = vmin.f32 %v470, %v471
        %vm473 = vcmp.eq.f32.partialorder %v326, %v445
        %vm474 = vcmp.eq.f32.partialorder %v328, %v454
        %vm475 = vcmp.eq.f32.partialorder %v415, %v463
        %vm476 = vcmp.eq.f32.partialorder %v417, %v472
        %vm477 = vcmp.eq.f32.partialorder %v332, %v445
        %vm478 = vcmp.eq.f32.partialorder %v334, %v454
        %vm479 = vcmp.eq.f32.partialorder %v421, %v463
        %vm480 = vcmp.eq.f32.partialorder %v423, %v472
        %vm481 = vcmp.eq.f32.partialorder %v338, %v445
        %vm482 = vcmp.eq.f32.partialorder %v340, %v454
        %vm483 = vcmp.eq.f32.partialorder %v427, %v463
        %vm484 = vcmp.eq.f32.partialorder %v429, %v472
        %vm485 = vcmp.eq.f32.partialorder %v344, %v445
        %vm486 = vcmp.eq.f32.partialorder %v346, %v454
        %vm487 = vcmp.eq.f32.partialorder %v433, %v463
        %vm488 = vcmp.eq.f32.partialorder %v435, %v472
        %v489 = vsel %vm473, %v218, 32
        %v490 = vsel %vm474, %v218, 32
        %v491 = vsel %vm475, %v218, 32
        %v492 = vsel %vm476, %v218, 32
        %v493 = vsel %vm477, %v219, 32
        %v494 = vsel %vm478, %v219, 32
        %v495 = vsel %vm479, %v219, 32
        %v496 = vsel %vm480, %v219, 32
        %v497 = vsel %vm481, %v220, 32
        %v498 = vsel %vm482, %v220, 32
        %v499 = vsel %vm483, %v220, 32
        %v500 = vsel %vm484, %v220, 32
        %v501 = vsel %vm485, %v221, 32
        %v502 = vsel %vm486, %v221, 32
        %v503 = vsel %vm487, %v221, 32
        %v504 = vsel %vm488, %v221, 32
        %vm505 = vcmp.lt.s32.totalorder %v489, %v493
        %v506 = vsel %vm505, %v489, %v493
        %vm507 = vcmp.lt.s32.totalorder %v506, %v497
        %v508 = vsel %vm507, %v506, %v497
        %vm509 = vcmp.lt.s32.totalorder %v508, %v501
        %v510 = vsel %vm509, %v508, %v501
        %v511 = vrot.slane %v510, 4
        %vm512 = vcmp.lt.s32.totalorder %v510, %v511
        %v513 = vsel %vm512, %v510, %v511
        %v514 = vrot.slane %v513, 2
        %vm515 = vcmp.lt.s32.totalorder %v513, %v514
        %v516 = vsel %vm515, %v513, %v514
        %v517 = vrot.slane %v516, 1
        %vm518 = vcmp.lt.s32.totalorder %v516, %v517
        %v519 = vsel %vm518, %v516, %v517
        %vm520 = vcmp.lt.s32.totalorder %v490, %v494
        %v521 = vsel %vm520, %v490, %v494
        %vm522 = vcmp.lt.s32.totalorder %v521, %v498
        %v523 = vsel %vm522, %v521, %v498
        %vm524 = vcmp.lt.s32.totalorder %v523, %v502
        %v525 = vsel %vm524, %v523, %v502
        %v526 = vrot.slane %v525, 4
        %vm527 = vcmp.lt.s32.totalorder %v525, %v526
        %v528 = vsel %vm527, %v525, %v526
        %v529 = vrot.slane %v528, 2
        %vm530 = vcmp.lt.s32.totalorder %v528, %v529
        %v531 = vsel %vm530, %v528, %v529
        %v532 = vrot.slane %v531, 1
        %vm533 = vcmp.lt.s32.totalorder %v531, %v532
        %v534 = vsel %vm533, %v531, %v532
        %vm535 = vcmp.lt.s32.totalorder %v491, %v495
        %v536 = vsel %vm535, %v491, %v495
        %vm537 = vcmp.lt.s32.totalorder %v536, %v499
        %v538 = vsel %vm537, %v536, %v499
        %vm539 = vcmp.lt.s32.totalorder %v538, %v503
        %v540 = vsel %vm539, %v538, %v503
        %v541 = vrot.slane %v540, 4
        %vm542 = vcmp.lt.s32.totalorder %v540, %v541
        %v543 = vsel %vm542, %v540, %v541
        %v544 = vrot.slane %v543, 2
        %vm545 = vcmp.lt.s32.totalorder %v543, %v544
        %v546 = vsel %vm545, %v543, %v544
        %v547 = vrot.slane %v546, 1
        %vm548 = vcmp.lt.s32.totalorder %v546, %v547
        %v549 = vsel %vm548, %v546, %v547
        %vm550 = vcmp.lt.s32.totalorder %v492, %v496
        %v551 = vsel %vm550, %v492, %v496
        %vm552 = vcmp.lt.s32.totalorder %v551, %v500
        %v553 = vsel %vm552, %v551, %v500
        %vm554 = vcmp.lt.s32.totalorder %v553, %v504
        %v555 = vsel %vm554, %v553, %v504
        %v556 = vrot.slane %v555, 4
        %vm557 = vcmp.lt.s32.totalorder %v555, %v556
        %v558 = vsel %vm557, %v555, %v556
        %v559 = vrot.slane %v558, 2
        %vm560 = vcmp.lt.s32.totalorder %v558, %v559
        %v561 = vsel %vm560, %v558, %v559
        %v562 = vrot.slane %v561, 1
        %vm563 = vcmp.lt.s32.totalorder %v561, %v562
        %v564 = vsel %vm563, %v561, %v562
        %v565 = vcombine.low %v519, %v534
        %v566 = vcombine.low %v549, %v564
        %v568 = vunpack.c.l.s4 1966171168
        %v569 = vunpack.c.0.s8 %v568
        %v570 = vlaneseq
        %v571 = vshrl.u32 %v570, 7
        %v572 = vsub.s32 %v569, %v571
        %v573 = vrot.slane %v565, %v572
        %v575 = vunpack.c.l.s4 1966171168
        %v576 = vunpack.c.0.s8 %v575
        %v577 = vlaneseq
        %v578 = vshrl.u32 %v577, 7
        %v579 = vsub.s32 %v576, %v578
        %v580 = vrot.slane %v566, %v579
        %v581 = vcombine.low %v573, %v580
        %v583 = vunpack.c.l.s4 1966171168
        %v584 = vunpack.c.0.s8 %v583
        %v585 = vlaneseq
        %v586 = vshrl.u32 %v585, 7
        %v587 = vsub.s32 %v584, %v586
        %v588 = vrot.slane %v581, %v587
        %v589 = vlaneseq
        %vm590 = vcmp.ge.s32.totalorder %v589, 0
        %vm591 = vcmp.lt.s32.totalorder %v589, 512
        %vm592 = vmand %vm590, %vm591
        %593 = vst.msk [vmem:[%s194] sm:$0xf] %vm592, %v588
        %s594 = sand.u32 %s109, 1
        %s595 = scalar_lea.sflag [#allocation3], %s594
        %s596 = sand.u32 %s109, 1
        %s597 = smul.addr %s596, 4
        %s598 = scalar_lea.vmem [#allocation2], %s597
        // Predicated region
        $region33: #{tpu_custom_call.1} parent=31 // pred_check
          %p599 = pneg %p119
        $region34: #{tpu_custom_call.1} parent=31 // pred_check_branch
          %601 = sbr.rel (%p599) target = $region36
        $region35: #{tpu_custom_call.1} parent=31 // pred_region
          %s603 = ssub.s32 64, 64
          %604 = vsyncadd %s595, %s603
          %s605 = smul.addr %s22, 4
          %s606 = smul.addr %s21, 4
          %s607 = sadd.s32 %s605, %s606
          %s608 = smul.addr %s607, 16
          %s609 = scalar_lea.hbm %s3, %s608
          %s611 = sshll.u32 %s598, 4
          %s612 = int_to_ptr.vmem [resolvable:$true] %s611
          %614 = dma.vmem_to_hbm [thread:$0]  %s612, 64, %s609, %s595
        $region36: #{tpu_custom_call.1} parent=31 // pred_fallthru
          _
      $region32: #{tpu_custom_call.1} parent=5 // pred_fallthru
        _
      %p615 = scmp.le.s32.totalorder 2, %s12
      // Predicated region
      $region37: #{tpu_custom_call.1} parent=5 // pred_check
        %p616 = pneg %p615
      $region38: #{tpu_custom_call.1} parent=5 // pred_check_branch
        %618 = sbr.rel (%p616) target = $region40
      $region39: #{tpu_custom_call.1} parent=5 // pred_region
        %s619 = ssub.s32 %s12, 2
        // Predicated region
        $region41: #{tpu_custom_call.1} parent=39 // pred_check
          %p620 = pneg %p125
        $region42: #{tpu_custom_call.1} parent=39 // pred_check_branch
          %622 = sbr.rel (%p620) target = $region44
        $region43: #{tpu_custom_call.1} parent=39 // pred_region
          %s623 = sand.u32 %s110, 1
          %s624 = scalar_lea.sflag [#allocation3], %s623
          %s625 = sand.u32 %s110, 1
          %s626 = smul.addr %s625, 4
          %s627 = scalar_lea.vmem [#allocation2], %s626
          %628 = dma.done %s624, 64
        $region44: #{tpu_custom_call.1} parent=39 // pred_fallthru
          _
      $region40: #{tpu_custom_call.1} parent=5 // pred_fallthru
        _
    $region6: #{tpu_custom_call.1} parent=1 // loop_footer
      %s16 = sadd.s32 1, %s12
    $region7: #{tpu_custom_call.1} parent=1 // loop_footer_branch
      %11 = sbr.rel target = $region3
    $region8: #{tpu_custom_call.1} parent=1 // loop_exit
      _
    %629 = vsyncpa [#allocation3], 1
    %s630 = scalar_lea.sflag [#allocation3], 1
    %631 = vsyncpa %s630, 1

</llo_original>
